<compile_context>
chip_gen: v7x
topology: tpu7x:2x2x1
jax: 0.10.0
libtpu: 0.0.40
codegen_flags: <defaults>
</compile_context>

<pallas_src>
import jax
import jax.numpy as jnp
from jax.experimental import pallas as pl
from jax.experimental.pallas import tpu as pltpu


LANES = 1024          # lane-dense minor dim (multiple of 128)
MAX_TILE_ROWS = 1024  # 1024 x 1024 x 4 B = 4 MiB per f32 tile


def _make_mul_kernel(const):
    def _mul_kernel(x_ref, o_ref):
        # `const` is baked in at trace time (weakly-typed Python scalar, so the
        # multiply keeps the input dtype; the astype is a safety no-op for floats).
        o_ref[...] = (x_ref[...] * const).astype(o_ref.dtype)
    return _mul_kernel


def mul_pallas(x: jax.Array, const) -> jax.Array:
    """Elementwise multiply by a scalar constant, computed in a Pallas TPU kernel."""
    orig_shape = x.shape
    dtype = x.dtype
    total = x.size
    if total == 0:
        return x

    flat = x.reshape(-1)

    # --- fold to a lane-dense (rows, LANES) slab ---
    rows = -(-total // LANES)                      # ceil-div
    padded_total = rows * LANES
    needs_pad = padded_total != total
    if needs_pad:
        # Slow path only for ragged sizes: pad < LANES elements.
        flat = jnp.pad(flat, (0, padded_total - total))
    x2 = flat.reshape(rows, LANES)

    # Sublane-aligned row tile; ragged last block (if any) is masked by Pallas.
    tile_rows = min(MAX_TILE_ROWS, ((rows + 7) // 8) * 8)
    grid = (pl.cdiv(rows, tile_rows),)

    out2 = pl.pallas_call(
        _make_mul_kernel(const),
        out_shape=jax.ShapeDtypeStruct((rows, LANES), dtype),
        grid=grid,
        in_specs=[pl.BlockSpec((tile_rows, LANES), lambda i: (i, 0))],
        out_specs=pl.BlockSpec((tile_rows, LANES), lambda i: (i, 0)),
        compiler_params=pltpu.CompilerParams(
            dimension_semantics=("parallel",),
            vmem_limit_bytes=32 * 1024 * 1024,
        ),
    )(x2)

    out_flat = out2.reshape(-1)
    if needs_pad:
        out_flat = out_flat[:total]
    return out_flat.reshape(orig_shape)


# TODO(synk): Mul.inverse (inp / const) is not part of the forward pass and is not implemented.


if __name__ == "__main__":
    key = jax.random.PRNGKey(0)
    const = 2.5  # deterministic constant (module's __init__ takes `const`)

    # NCHW input, small shape: batch=2, channels=4, spatial=16x16 (2048 elems -> fast path).
    x = jax.random.normal(key, (2, 4, 16, 16), dtype=jnp.float32)
    out = jax.block_until_ready(mul_pallas(x, const))
    ref = x * const
    assert out.shape == x.shape and out.dtype == x.dtype
    assert jnp.allclose(out, ref, atol=1e-6, rtol=1e-6)

    # Odd-sized input to exercise the pad / ragged-block / slice path.
    key2 = jax.random.PRNGKey(1)
    y = jax.random.normal(key2, (3, 5, 7), dtype=jnp.float32)
    out_y = jax.block_until_ready(mul_pallas(y, const))
    assert out_y.shape == y.shape and out_y.dtype == y.dtype
    assert jnp.allclose(out_y, y * const, atol=1e-6, rtol=1e-6)

    # bf16 input to check dtype preservation via weak-typed const.
    z = jax.random.normal(key, (2, 8, 32), dtype=jnp.bfloat16)
    out_z = jax.block_until_ready(mul_pallas(z, const))
    assert out_z.dtype == jnp.bfloat16
    assert jnp.allclose(out_z.astype(jnp.float32), (z * const).astype(jnp.float32),
                        atol=1e-2, rtol=1e-2)

    print("KERNEL_OK")
</pallas_src>

<mosaic_0001>
module attributes {stable_mosaic.version = 11 : i64} {
  func.func @_mul_kernel(%arg0: i32, %arg1: memref<8x1024xf32, #tpu.memory_space<vmem>>, %arg2: memref<8x1024xf32, #tpu.memory_space<vmem>>) attributes {dimension_semantics = [#tpu.dimension_semantics<parallel>], iteration_bounds = array<i64: 1>, scalar_prefetch = 0 : i64, scratch_operands = 0 : i64, tpu.core_type = #tpu.core_type<tc>, window_params = [{transform_indices = @transform_0, window_bounds = array<i64: 8, 1024>}, {transform_indices = @transform_1, window_bounds = array<i64: 8, 1024>}]} {
    %c0 = arith.constant 0 : index
    %c0_0 = arith.constant 0 : index
    %0 = vector.load %arg1[%c0, %c0_0] : memref<8x1024xf32, #tpu.memory_space<vmem>>, vector<8x1024xf32>
    %cst = arith.constant 2.500000e+00 : f32
    %1 = vector.broadcast %cst : f32 to vector<8x1024xf32>
    %2 = arith.mulf %0, %1 : vector<8x1024xf32>
    %c0_1 = arith.constant 0 : index
    %c0_2 = arith.constant 0 : index
    %3 = vector.load %arg2[%c0_1, %c0_2] : memref<8x1024xf32, #tpu.memory_space<vmem>>, vector<8x1024xf32>
    tpu.vector_store %arg2[%c0_1, %c0_2], %2 {strides = array<i32>} : memref<8x1024xf32, #tpu.memory_space<vmem>>, vector<8x1024xf32>,
    return
  }
  func.func @transform_0(%arg0: i32) -> (i32, i32) {
    %c0_i32 = arith.constant 0 : i32
    %c0_i32_0 = arith.constant 0 : i32
    return %arg0, %c0_i32 : i32, i32
  }
  func.func @transform_1(%arg0: i32) -> (i32, i32) {
    %c0_i32 = arith.constant 0 : i32
    %c0_i32_0 = arith.constant 0 : i32
    return %arg0, %c0_i32 : i32, i32
  }
}

</mosaic_0001>

<llo_original>
// kernel: tpu_custom_call.1
$region0: #{tpu_custom_call.1}
  #allocation0 [shape = 'u32[]', space=smem, size = 0x4, offset = 0x4, fixed_abs, tag = 'smem constant byte address 0x4 - core index']
  #allocation1 [shape = 'u32[144,128]{1,0:T(1,128)}', space=vmem, size = 0x12000, scoped, tag = 'internal scratch']
  %s0 = inlined_call_operand.hbm [shape: f32[2,1024], index: 0, kind: input, shape index: {}]
  %s1 = inlined_call_operand.hbm [shape: f32[2,1024], index: 1, kind: output, shape index: {}]
  %s2 = sld [smem:[#allocation0]]
  $region18: #{tpu_custom_call.1} parent=0
    _
  %s4 = ssub.s32 1, %s2
  %s5 = scalar_select 0, %s4, %s2
  $region1: #{tpu_custom_call.1} parent=0
    #allocation2 [shape = 'u8[32768]{0}', space=vmem, size = 0x8000, scoped, tag = 'input window, operand 0, single buffered']
    #allocation3 [shape = 's32[1]{0}', space=sflag, size = 0x4, scoped, tag = 'scoped memory for tpu_custom_call.1']
    #allocation4 [shape = 's32[1]{0}', space=sflag, size = 0x4, scoped, tag = 'scoped memory for tpu_custom_call.1']
    #allocation5 [shape = 'u8[32768]{0}', space=vmem, size = 0x8000, scoped, tag = 'output window, operand 0, single buffered']
    %6 = vsyncpa [#allocation3], 0
    %7 = vsyncpa [#allocation4], 0
    // Predicated region
    $region2: #{tpu_custom_call.1} parent=1 // pred_check
      _
    $region3: #{tpu_custom_call.1} parent=1 // pred_check_branch
      %9 = sbr.rel (0) target = $region5
    $region4: #{tpu_custom_call.1} parent=1 // pred_region
      %s11 = ssub.s32 1024, 256
      %12 = vsyncadd [#allocation3], %s11
      %s13 = sshll.u32 [#allocation2], 4
      %s14 = int_to_ptr.vmem [resolvable:$true] %s13
      %19 = dma.hbm_to_vmem [thread:$0]  %s0, 256, %s14, [#allocation3], 256, 256, 16
    $region5: #{tpu_custom_call.1} parent=1 // pred_fallthru
      _
    // Predicated region
    $region6: #{tpu_custom_call.1} parent=1 // pred_check
      _
    $region7: #{tpu_custom_call.1} parent=1 // pred_check_branch
      %21 = sbr.rel (0) target = $region9
    $region8: #{tpu_custom_call.1} parent=1 // pred_region
      %22 = dma.done [#allocation3], 1024
    $region9: #{tpu_custom_call.1} parent=1 // pred_fallthru
      _
    %v23 = vld [vmem:[#allocation2] sm:$0xff]
    %v24 = vld [vmem:[#allocation2 + $0x8] sm:$0xff]
    %v25 = vld [vmem:[#allocation2 + $0x10] sm:$0xff]
    %v26 = vld [vmem:[#allocation2 + $0x18] sm:$0xff]
    %v27 = vld [vmem:[#allocation2 + $0x20] sm:$0xff]
    %v28 = vld [vmem:[#allocation2 + $0x28] sm:$0xff]
    %v29 = vld [vmem:[#allocation2 + $0x30] sm:$0xff]
    %v30 = vld [vmem:[#allocation2 + $0x38] sm:$0xff]
    %v31 = vmul.f32 %v23, 2.5
    %v32 = vmul.f32 %v24, 2.5
    %v33 = vmul.f32 %v25, 2.5
    %v34 = vmul.f32 %v26, 2.5
    %v35 = vmul.f32 %v27, 2.5
    %v36 = vmul.f32 %v28, 2.5
    %v37 = vmul.f32 %v29, 2.5
    %v38 = vmul.f32 %v30, 2.5
    %39 = vst [vmem:[#allocation5] sm:$0xff] %v31
    %40 = vst [vmem:[#allocation5 + $0x8] sm:$0xff] %v32
    %41 = vst [vmem:[#allocation5 + $0x10] sm:$0xff] %v33
    %42 = vst [vmem:[#allocation5 + $0x18] sm:$0xff] %v34
    %43 = vst [vmem:[#allocation5 + $0x20] sm:$0xff] %v35
    %44 = vst [vmem:[#allocation5 + $0x28] sm:$0xff] %v36
    %45 = vst [vmem:[#allocation5 + $0x30] sm:$0xff] %v37
    %46 = vst [vmem:[#allocation5 + $0x38] sm:$0xff] %v38
    // Predicated region
    $region10: #{tpu_custom_call.1} parent=1 // pred_check
      _
    $region11: #{tpu_custom_call.1} parent=1 // pred_check_branch
      %48 = sbr.rel (0) target = $region13
    $region12: #{tpu_custom_call.1} parent=1 // pred_region
      %s50 = ssub.s32 1024, 256
      %51 = vsyncadd [#allocation4], %s50
      %s52 = sshll.u32 [#allocation5], 4
      %s53 = int_to_ptr.vmem [resolvable:$true] %s52
      %58 = dma.vmem_to_hbm [thread:$0]  %s53, 256, %s1, [#allocation4], 256, 256, 16
    $region13: #{tpu_custom_call.1} parent=1 // pred_fallthru
      _
    // Predicated region
    $region14: #{tpu_custom_call.1} parent=1 // pred_check
      _
    $region15: #{tpu_custom_call.1} parent=1 // pred_check_branch
      %60 = sbr.rel (0) target = $region17
    $region16: #{tpu_custom_call.1} parent=1 // pred_region
      %61 = dma.done [#allocation4], 1024
    $region17: #{tpu_custom_call.1} parent=1 // pred_fallthru
      _
    %62 = vsyncpa [#allocation3], 1
    %63 = vsyncpa [#allocation4], 1

</llo_original>
